<compile_context>
chip_gen: v5e
topology: v5e:2x2
jax: 0.10.0
libtpu: 0.0.40
codegen_flags: <defaults>
</compile_context>

<pallas_src>
import jax
import jax.numpy as jnp
from jax.experimental import pallas as pl
from jax.experimental.pallas import tpu as pltpu

DT = 1e-3  # norse default integration timestep

# Row order inside the stacked [8, N] parameter block.
#   0: w_in  1: r  2: dt*tau_syn_inv  3: v_leak_syn
#   4: dt*tau_mem_inv  5: v_leak  6: v_th  7: v_reset


def _cuba_lif_kernel_init(x_ref, p_ref, z_ref, syn_v_ref, lif_v_ref):
    """state=None path: initial v_syn = v_leak_syn, v = v_leak (leak terms cancel)."""
    x = x_ref[...]
    w_in       = p_ref[0:1, :]
    r          = p_ref[1:2, :]
    dt_tau_syn = p_ref[2:3, :]
    v_leak_syn = p_ref[3:4, :]
    dt_tau_mem = p_ref[4:5, :]
    v_leak     = p_ref[5:6, :]
    v_th       = p_ref[6:7, :]
    v_reset    = p_ref[7:8, :]

    i_in = w_in * x
    v_syn_new = v_leak_syn + dt_tau_syn * i_in          # (v_leak_syn - v_syn0) == 0
    i_lif = r * v_syn_new
    v_dec = v_leak + dt_tau_mem * i_lif                 # (v_leak - v0) == 0
    spike = v_dec > v_th

    z_ref[...] = spike.astype(x.dtype)
    syn_v_ref[...] = v_syn_new
    lif_v_ref[...] = jnp.where(spike, v_reset, v_dec)


def _cuba_lif_kernel_state(x_ref, p_ref, syn0_ref, lif0_ref,
                           z_ref, syn_v_ref, lif_v_ref):
    """state provided: full CubaLIF update with [B, N] state tensors."""
    x = x_ref[...]
    w_in       = p_ref[0:1, :]
    r          = p_ref[1:2, :]
    dt_tau_syn = p_ref[2:3, :]
    v_leak_syn = p_ref[3:4, :]
    dt_tau_mem = p_ref[4:5, :]
    v_leak     = p_ref[5:6, :]
    v_th       = p_ref[6:7, :]
    v_reset    = p_ref[7:8, :]

    v_syn = syn0_ref[...]
    v_syn_new = v_syn + dt_tau_syn * ((v_leak_syn - v_syn) + w_in * x)
    i_lif = r * v_syn_new

    v = lif0_ref[...]
    v_dec = v + dt_tau_mem * ((v_leak - v) + i_lif)
    spike = v_dec > v_th

    z_ref[...] = spike.astype(x.dtype)
    syn_v_ref[...] = v_syn_new
    lif_v_ref[...] = jnp.where(spike, v_reset, v_dec)


def cuba_lif_forward(x, params, state=None, *, max_block_rows=512):
    """Single-step CubaLIF forward.

    x: [B, N] float32
    params: dict of per-neuron [N] vectors:
        w_in, r, tau_syn_inv, v_leak_syn, tau_mem_inv, v_leak, v_th, v_reset
    state: None or (syn_v [B, N], lif_v [B, N])
    returns (z [B, N], (syn_v_new [B, N], lif_v_new [B, N]))
    """
    B, N = x.shape
    dtype = x.dtype
    itemsize = jnp.dtype(dtype).itemsize

    def vec(name):
        return jnp.asarray(params[name], dtype).reshape(N)

    # Stack per-neuron params into a single [8, N] block; fold dt into taus.
    p_stack = jnp.stack(
        [
            vec("w_in"),
            vec("r"),
            jnp.asarray(DT, dtype) * vec("tau_syn_inv"),
            vec("v_leak_syn"),
            jnp.asarray(DT, dtype) * vec("tau_mem_inv"),
            vec("v_leak"),
            vec("v_th"),
            vec("v_reset"),
        ],
        axis=0,
    )

    have_state = state is not None

    # Row-block sizing: multiple of 8 sublanes, capped against a conservative
    # double-buffered VMEM budget (fits v7x's smaller VMEM as well).
    n_row_streams = 6 if have_state else 4     # x (+2 state) + 3 outputs
    vmem_budget = 24 * 1024 * 1024
    row_bytes = N * itemsize
    cap = max(8, (vmem_budget // (2 * n_row_streams * row_bytes)) // 8 * 8)
    block_B = min(max_block_rows, cap)
    block_B = max(8, (block_B // 8) * 8)
    if B <= block_B:
        block_B = max(8, ((B + 7) // 8) * 8)   # round small batches up to 8 rows
    padded_B = ((B + block_B - 1) // block_B) * block_B

    def pad_rows(a):
        if padded_B == B:
            return a
        return jnp.pad(a, ((0, padded_B - B), (0, 0)))

    x_p = pad_rows(x)

    row_spec = pl.BlockSpec((block_B, N), lambda i: (i, 0))
    par_spec = pl.BlockSpec((8, N), lambda i: (0, 0))   # constant -> re-DMA elided
    out_shape = [jax.ShapeDtypeStruct((padded_B, N), dtype)] * 3
    out_specs = [row_spec] * 3
    grid = (padded_B // block_B,)
    cparams = pltpu.CompilerParams(
        dimension_semantics=("parallel",),
        vmem_limit_bytes=64 * 1024 * 1024,
    )

    if have_state:
        syn0 = pad_rows(jnp.asarray(state[0], dtype))
        lif0 = pad_rows(jnp.asarray(state[1], dtype))
        z, syn_v, lif_v = pl.pallas_call(
            _cuba_lif_kernel_state,
            grid=grid,
            in_specs=[row_spec, par_spec, row_spec, row_spec],
            out_specs=out_specs,
            out_shape=out_shape,
            compiler_params=cparams,
        )(x_p, p_stack, syn0, lif0)
    else:
        z, syn_v, lif_v = pl.pallas_call(
            _cuba_lif_kernel_init,
            grid=grid,
            in_specs=[row_spec, par_spec],
            out_specs=out_specs,
            out_shape=out_shape,
            compiler_params=cparams,
        )(x_p, p_stack)

    if padded_B != B:
        z, syn_v, lif_v = z[:B], syn_v[:B], lif_v[:B]
    return z, (syn_v, lif_v)

# TODO(synk): when driven per-timestep from a lax.scan, fuse the time loop
# into the kernel (grid axis over T, state resident in VMEM) to avoid the
# per-step HBM round-trip of the two state tensors.


def _reference(x, params, state=None):
    """Pure-jnp reference mirroring the PyTorch/norse semantics."""
    dtype = x.dtype
    B, N = x.shape
    p = {k: jnp.broadcast_to(jnp.asarray(v, dtype).reshape(1, N), (B, N))
         for k, v in params.items()}
    if state is None:
        syn_v, lif_v = p["v_leak_syn"], p["v_leak"]
    else:
        syn_v, lif_v = state
    i_in = p["w_in"] * x
    syn_v_new = syn_v + DT * p["tau_syn_inv"] * ((p["v_leak_syn"] - syn_v) + i_in)
    i_lif = p["r"] * syn_v_new
    v_dec = lif_v + DT * p["tau_mem_inv"] * ((p["v_leak"] - lif_v) + i_lif)
    z = (v_dec - p["v_th"] > 0).astype(dtype)
    lif_v_new = (1.0 - z) * v_dec + z * p["v_reset"]
    return z, (syn_v_new, lif_v_new)


if __name__ == "__main__":
    B, N = 2, 128  # batch, neurons

    key = jax.random.PRNGKey(0)
    kx, ks, kl = jax.random.split(key, 3)
    x = jax.random.normal(kx, (B, N), dtype=jnp.float32)

    # Deterministic synthetic parameters (per-neuron vectors).
    n_idx = jnp.arange(N, dtype=jnp.float32)
    params = {
        "w_in":        10.0 + 0.01 * n_idx,
        "r":           5.0 * jnp.ones((N,), jnp.float32),
        "tau_syn_inv": 200.0 * jnp.ones((N,), jnp.float32),   # 1 / 5 ms
        "v_leak_syn":  jnp.zeros((N,), jnp.float32),
        "tau_mem_inv": 100.0 * jnp.ones((N,), jnp.float32),   # 1 / 10 ms
        "v_leak":      jnp.zeros((N,), jnp.float32),
        "v_th":        0.05 * jnp.ones((N,), jnp.float32),
        "v_reset":     jnp.zeros((N,), jnp.float32),
    }

    # --- state=None path ---
    z, (syn_v, lif_v) = cuba_lif_forward(x, params, state=None)
    jax.block_until_ready((z, syn_v, lif_v))
    z_ref, (syn_ref, lif_ref) = _reference(x, params, state=None)
    assert jnp.allclose(z, z_ref, atol=1e-6), "spike mismatch (state=None)"
    assert jnp.allclose(syn_v, syn_ref, atol=1e-6), "synapse state mismatch (state=None)"
    assert jnp.allclose(lif_v, lif_ref, atol=1e-6), "lif state mismatch (state=None)"

    # --- state provided path ---
    syn0 = 0.1 * jax.random.normal(ks, (B, N), dtype=jnp.float32)
    lif0 = 0.1 * jax.random.normal(kl, (B, N), dtype=jnp.float32)
    z2, (syn_v2, lif_v2) = cuba_lif_forward(x, params, state=(syn0, lif0))
    jax.block_until_ready((z2, syn_v2, lif_v2))
    z2_ref, (syn2_ref, lif2_ref) = _reference(x, params, state=(syn0, lif0))
    assert jnp.allclose(z2, z2_ref, atol=1e-6), "spike mismatch (state)"
    assert jnp.allclose(syn_v2, syn2_ref, atol=1e-6), "synapse state mismatch (state)"
    assert jnp.allclose(lif_v2, lif2_ref, atol=1e-6), "lif state mismatch (state)"

    print("KERNEL_OK")
</pallas_src>

<mosaic_0001>
module attributes {stable_mosaic.version = 11 : i64} {
  func.func @_cuba_lif_kernel_init(%arg0: i32, %arg1: memref<8x128xf32, #tpu.memory_space<vmem>>, %arg2: memref<8x128xf32, #tpu.memory_space<vmem>>, %arg3: memref<8x128xf32, #tpu.memory_space<vmem>>, %arg4: memref<8x128xf32, #tpu.memory_space<vmem>>, %arg5: memref<8x128xf32, #tpu.memory_space<vmem>>) attributes {dimension_semantics = [#tpu.dimension_semantics<parallel>], iteration_bounds = array<i64: 1>, scalar_prefetch = 0 : i64, scratch_operands = 0 : i64, tpu.core_type = #tpu.core_type<tc>, window_params = [{transform_indices = @transform_0, window_bounds = array<i64: 8, 128>}, {pipeline_mode = #tpu.pipeline_mode<synchronous>, transform_indices = @transform_1, window_bounds = array<i64: 8, 128>}, {transform_indices = @transform_2, window_bounds = array<i64: 8, 128>}, {transform_indices = @transform_3, window_bounds = array<i64: 8, 128>}, {transform_indices = @transform_4, window_bounds = array<i64: 8, 128>}]} {
    %c0 = arith.constant 0 : index
    %c0_0 = arith.constant 0 : index
    %0 = vector.load %arg1[%c0, %c0_0] : memref<8x128xf32, #tpu.memory_space<vmem>>, vector<8x128xf32>
    %c0_1 = arith.constant 0 : index
    %c0_2 = arith.constant 0 : index
    %1 = vector.load %arg2[%c0_1, %c0_2] : memref<8x128xf32, #tpu.memory_space<vmem>>, vector<1x128xf32>
    %c1 = arith.constant 1 : index
    %c0_3 = arith.constant 0 : index
    %2 = vector.load %arg2[%c1, %c0_3] : memref<8x128xf32, #tpu.memory_space<vmem>>, vector<1x128xf32>
    %c2 = arith.constant 2 : index
    %c0_4 = arith.constant 0 : index
    %3 = vector.load %arg2[%c2, %c0_4] : memref<8x128xf32, #tpu.memory_space<vmem>>, vector<1x128xf32>
    %c3 = arith.constant 3 : index
    %c0_5 = arith.constant 0 : index
    %4 = vector.load %arg2[%c3, %c0_5] : memref<8x128xf32, #tpu.memory_space<vmem>>, vector<1x128xf32>
    %c4 = arith.constant 4 : index
    %c0_6 = arith.constant 0 : index
    %5 = vector.load %arg2[%c4, %c0_6] : memref<8x128xf32, #tpu.memory_space<vmem>>, vector<1x128xf32>
    %c5 = arith.constant 5 : index
    %c0_7 = arith.constant 0 : index
    %6 = vector.load %arg2[%c5, %c0_7] : memref<8x128xf32, #tpu.memory_space<vmem>>, vector<1x128xf32>
    %c6 = arith.constant 6 : index
    %c0_8 = arith.constant 0 : index
    %7 = vector.load %arg2[%c6, %c0_8] : memref<8x128xf32, #tpu.memory_space<vmem>>, vector<1x128xf32>
    %c7 = arith.constant 7 : index
    %c0_9 = arith.constant 0 : index
    %8 = vector.load %arg2[%c7, %c0_9] : memref<8x128xf32, #tpu.memory_space<vmem>>, vector<1x128xf32>
    %9 = vector.broadcast %1 : vector<1x128xf32> to vector<8x128xf32>
    %10 = arith.mulf %9, %0 : vector<8x128xf32>
    %11 = vector.broadcast %3 : vector<1x128xf32> to vector<8x128xf32>
    %12 = arith.mulf %11, %10 : vector<8x128xf32>
    %13 = vector.broadcast %4 : vector<1x128xf32> to vector<8x128xf32>
    %14 = arith.addf %13, %12 : vector<8x128xf32>
    %15 = vector.broadcast %2 : vector<1x128xf32> to vector<8x128xf32>
    %16 = arith.mulf %15, %14 : vector<8x128xf32>
    %17 = vector.broadcast %5 : vector<1x128xf32> to vector<8x128xf32>
    %18 = arith.mulf %17, %16 : vector<8x128xf32>
    %19 = vector.broadcast %6 : vector<1x128xf32> to vector<8x128xf32>
    %20 = arith.addf %19, %18 : vector<8x128xf32>
    %21 = vector.broadcast %7 : vector<1x128xf32> to vector<8x128xf32>
    %22 = arith.cmpf ogt, %20, %21 : vector<8x128xf32>
    %23 = arith.extui %22 : vector<8x128xi1> to vector<8x128xi32>
    %24 = arith.sitofp %23 : vector<8x128xi32> to vector<8x128xf32>
    %c0_10 = arith.constant 0 : index
    %c0_11 = arith.constant 0 : index
    %25 = vector.load %arg3[%c0_10, %c0_11] : memref<8x128xf32, #tpu.memory_space<vmem>>, vector<8x128xf32>
    tpu.vector_store %arg3[%c0_10, %c0_11], %24 {strides = array<i32>} : memref<8x128xf32, #tpu.memory_space<vmem>>, vector<8x128xf32>,
    %c0_12 = arith.constant 0 : index
    %c0_13 = arith.constant 0 : index
    %26 = vector.load %arg4[%c0_12, %c0_13] : memref<8x128xf32, #tpu.memory_space<vmem>>, vector<8x128xf32>
    tpu.vector_store %arg4[%c0_12, %c0_13], %14 {strides = array<i32>} : memref<8x128xf32, #tpu.memory_space<vmem>>, vector<8x128xf32>,
    %27 = vector.shape_cast %8 : vector<1x128xf32> to vector<1x128xf32>
    %28 = vector.broadcast %27 : vector<1x128xf32> to vector<8x128xf32>
    %29 = arith.select %22, %28, %20 : vector<8x128xi1>, vector<8x128xf32>
    %c0_14 = arith.constant 0 : index
    %c0_15 = arith.constant 0 : index
    %30 = vector.load %arg5[%c0_14, %c0_15] : memref<8x128xf32, #tpu.memory_space<vmem>>, vector<8x128xf32>
    tpu.vector_store %arg5[%c0_14, %c0_15], %29 {strides = array<i32>} : memref<8x128xf32, #tpu.memory_space<vmem>>, vector<8x128xf32>,
    return
  }
  func.func @transform_0(%arg0: i32) -> (i32, i32) {
    %c0_i32 = arith.constant 0 : i32
    %c0_i32_0 = arith.constant 0 : i32
    return %arg0, %c0_i32 : i32, i32
  }
  func.func @transform_1(%arg0: i32) -> (i32, i32) {
    %c0_i32 = arith.constant 0 : i32
    %c0_i32_0 = arith.constant 0 : i32
    %c0_i32_1 = arith.constant 0 : i32
    return %c0_i32, %c0_i32_0 : i32, i32
  }
  func.func @transform_2(%arg0: i32) -> (i32, i32) {
    %c0_i32 = arith.constant 0 : i32
    %c0_i32_0 = arith.constant 0 : i32
    return %arg0, %c0_i32 : i32, i32
  }
  func.func @transform_3(%arg0: i32) -> (i32, i32) {
    %c0_i32 = arith.constant 0 : i32
    %c0_i32_0 = arith.constant 0 : i32
    return %arg0, %c0_i32 : i32, i32
  }
  func.func @transform_4(%arg0: i32) -> (i32, i32) {
    %c0_i32 = arith.constant 0 : i32
    %c0_i32_0 = arith.constant 0 : i32
    return %arg0, %c0_i32 : i32, i32
  }
}

</mosaic_0001>

<llo_original>
// kernel: tpu_custom_call.1
$region0: #{tpu_custom_call.1}
  #allocation0 [shape = 'u32[]', space=smem, size = 0x4, offset = 0x4, fixed_abs, tag = 'smem constant byte address 0x4 - core index']
  #allocation1 [shape = 'u32[72,128]{1,0:T(1,128)}', space=vmem, size = 0x9000, scoped, tag = 'internal scratch']
  %s0 = inlined_call_operand.hbm [shape: f32[8,128], index: 0, kind: input, shape index: {}]
  %s1 = inlined_call_operand.hbm [shape: f32[8,128], index: 1, kind: input, shape index: {}]
  %s2 = inlined_call_operand.hbm [shape: f32[8,128], index: 2, kind: output, shape index: {0}]
  %s3 = inlined_call_operand.hbm [shape: f32[8,128], index: 3, kind: output, shape index: {1}]
  %s4 = inlined_call_operand.hbm [shape: f32[8,128], index: 4, kind: output, shape index: {2}]
  %5 = xla_tuple %s2, %s3, %s4
  %s6 = sld [smem:[#allocation0]]
  $region42: #{tpu_custom_call.1} parent=0
    _
  %s8 = ssub.s32 1, %s6
  %s9 = scalar_select 0, %s8, %s6
  $region1: #{tpu_custom_call.1} parent=0
    #allocation2 [shape = 'u8[4096]{0}', space=vmem, size = 0x1000, scoped, tag = 'input window, operand 0, single buffered']
    #allocation3 [shape = 's32[1]{0}', space=sflag, size = 0x4, scoped, tag = 'scoped memory for tpu_custom_call.1']
    #allocation4 [shape = 's32[1]{0}', space=sflag, size = 0x4, scoped, tag = 'scoped memory for tpu_custom_call.1']
    #allocation5 [shape = 'u8[4096]{0}', space=vmem, size = 0x1000, scoped, tag = 'input window, operand 1, single buffered']
    #allocation6 [shape = 's32[1]{0}', space=sflag, size = 0x4, scoped, tag = 'scoped memory for tpu_custom_call.1']
    #allocation7 [shape = 'u8[4096]{0}', space=vmem, size = 0x1000, scoped, tag = 'output window, operand 0, single buffered']
    #allocation8 [shape = 'u8[4096]{0}', space=vmem, size = 0x1000, scoped, tag = 'output window, operand 1, single buffered']
    #allocation9 [shape = 's32[1]{0}', space=sflag, size = 0x4, scoped, tag = 'scoped memory for tpu_custom_call.1']
    #allocation10 [shape = 'u8[4096]{0}', space=vmem, size = 0x1000, scoped, tag = 'output window, operand 2, single buffered']
    %10 = vsyncpa [#allocation3], 0
    %11 = vsyncpa [#allocation6], 0
    %12 = vsyncpa [#allocation4], 0
    %13 = vsyncpa [#allocation9], 0
    // Predicated region
    $region2: #{tpu_custom_call.1} parent=1 // pred_check
      _
    $region3: #{tpu_custom_call.1} parent=1 // pred_check_branch
      %15 = sbr.rel (0) target = $region5
    $region4: #{tpu_custom_call.1} parent=1 // pred_region
      %17 = vsyncadd [#allocation3], 0
      %s19 = sshll.u32 %s0, 4
      %s20 = int_to_ptr.hbm [resolvable:$true] %s19
      %s21 = sshll.u32 [#allocation2], 4
      %s22 = int_to_ptr.vmem [resolvable:$true] %s21
      %24 = dma.hbm_to_vmem [thread:$0]  %s20, 128, %s22, [#allocation3]
    $region5: #{tpu_custom_call.1} parent=1 // pred_fallthru
      _
    // Predicated region
    $region6: #{tpu_custom_call.1} parent=1 // pred_check
      _
    $region7: #{tpu_custom_call.1} parent=1 // pred_check_branch
      %26 = sbr.rel (0) target = $region9
    $region8: #{tpu_custom_call.1} parent=1 // pred_region
      %28 = vsyncadd [#allocation6], 0
      %s30 = sshll.u32 %s1, 4
      %s31 = int_to_ptr.hbm [resolvable:$true] %s30
      %s32 = sshll.u32 [#allocation5], 4
      %s33 = int_to_ptr.vmem [resolvable:$true] %s32
      %35 = dma.hbm_to_vmem [thread:$0]  %s31, 128, %s33, [#allocation6]
    $region9: #{tpu_custom_call.1} parent=1 // pred_fallthru
      _
    // Predicated region
    $region10: #{tpu_custom_call.1} parent=1 // pred_check
      _
    $region11: #{tpu_custom_call.1} parent=1 // pred_check_branch
      %37 = sbr.rel (0) target = $region13
    $region12: #{tpu_custom_call.1} parent=1 // pred_region
      %39 = dma.done [#allocation3], 128
    $region13: #{tpu_custom_call.1} parent=1 // pred_fallthru
      _
    // Predicated region
    $region14: #{tpu_custom_call.1} parent=1 // pred_check
      _
    $region15: #{tpu_custom_call.1} parent=1 // pred_check_branch
      %41 = sbr.rel (0) target = $region17
    $region16: #{tpu_custom_call.1} parent=1 // pred_region
      %43 = dma.done [#allocation6], 128
    $region17: #{tpu_custom_call.1} parent=1 // pred_fallthru
      _
    %v44 = vld [vmem:[#allocation2] sm:$0xff]
    %v45 = vld [vmem:[#allocation5] sm:$0x1]
    %v46 = vld [vmem:[#allocation5 + $0x1] sm:$0x1]
    %v47 = vld [vmem:[#allocation5 + $0x2] sm:$0x1]
    %v48 = vld [vmem:[#allocation5 + $0x3] sm:$0x1]
    %v49 = vld [vmem:[#allocation5 + $0x4] sm:$0x1]
    %v50 = vld [vmem:[#allocation5 + $0x5] sm:$0x1]
    %v51 = vld [vmem:[#allocation5 + $0x6] sm:$0x1]
    %v52 = vld [vmem:[#allocation5 + $0x7] sm:$0x1]
    %v53 = vperm.slane %v45, 0
    %v54 = vmul.f32 %v53, %v44
    %v55 = vperm.slane %v47, 0
    %v56 = vmul.f32 %v55, %v54
    %v57 = vperm.slane %v48, 0
    %v58 = vadd.f32 %v57, %v56
    %v59 = vperm.slane %v46, 0
    %v60 = vmul.f32 %v59, %v58
    %v61 = vperm.slane %v49, 0
    %v62 = vmul.f32 %v61, %v60
    %v63 = vperm.slane %v50, 0
    %v64 = vadd.f32 %v63, %v62
    %v65 = vperm.slane %v51, 0
    %vm66 = vcmp.gt.f32.partialorder %v64, %v65
    %v67 = vsel %vm66, 1, 0
    %v68 = vcvt.s32.f32 %v67
    %69 = vst [vmem:[#allocation7] sm:$0xff] %v68
    %70 = vst [vmem:[#allocation8] sm:$0xff] %v58
    %v71 = vperm.slane %v52, 0
    %v72 = vsel %vm66, %v71, %v64
    %73 = vst [vmem:[#allocation10] sm:$0xff] %v72
    // Predicated region
    $region18: #{tpu_custom_call.1} parent=1 // pred_check
      _
    $region19: #{tpu_custom_call.1} parent=1 // pred_check_branch
      %75 = sbr.rel (0) target = $region21
    $region20: #{tpu_custom_call.1} parent=1 // pred_region
      %77 = vsyncadd [#allocation4], 0
      %s79 = sshll.u32 [#allocation7], 4
      %s80 = int_to_ptr.vmem [resolvable:$true] %s79
      %s81 = sshll.u32 %s2, 4
      %s82 = int_to_ptr.hbm [resolvable:$true] %s81
      %84 = dma.vmem_to_hbm [thread:$0]  %s80, 128, %s82, [#allocation4]
    $region21: #{tpu_custom_call.1} parent=1 // pred_fallthru
      _
    // Predicated region
    $region22: #{tpu_custom_call.1} parent=1 // pred_check
      _
    $region23: #{tpu_custom_call.1} parent=1 // pred_check_branch
      %86 = sbr.rel (0) target = $region25
    $region24: #{tpu_custom_call.1} parent=1 // pred_region
      %88 = vsyncadd [#allocation9], 0
      %s90 = sshll.u32 [#allocation8], 4
      %s91 = int_to_ptr.vmem [resolvable:$true] %s90
      %s92 = sshll.u32 %s3, 4
      %s93 = int_to_ptr.hbm [resolvable:$true] %s92
      %95 = dma.vmem_to_hbm [thread:$0]  %s91, 128, %s93, [#allocation9]
    $region25: #{tpu_custom_call.1} parent=1 // pred_fallthru
      _
    // Predicated region
    $region26: #{tpu_custom_call.1} parent=1 // pred_check
      _
    $region27: #{tpu_custom_call.1} parent=1 // pred_check_branch
      %97 = sbr.rel (0) target = $region29
    $region28: #{tpu_custom_call.1} parent=1 // pred_region
      %99 = vsyncadd [#allocation9], 0
      %s101 = sshll.u32 [#allocation10], 4
      %s102 = int_to_ptr.vmem [resolvable:$true] %s101
      %s103 = sshll.u32 %s4, 4
      %s104 = int_to_ptr.hbm [resolvable:$true] %s103
      %106 = dma.vmem_to_hbm [thread:$0]  %s102, 128, %s104, [#allocation9]
    $region29: #{tpu_custom_call.1} parent=1 // pred_fallthru
      _
    // Predicated region
    $region30: #{tpu_custom_call.1} parent=1 // pred_check
      _
    $region31: #{tpu_custom_call.1} parent=1 // pred_check_branch
      %108 = sbr.rel (0) target = $region33
    $region32: #{tpu_custom_call.1} parent=1 // pred_region
      %110 = dma.done [#allocation4], 128
    $region33: #{tpu_custom_call.1} parent=1 // pred_fallthru
      _
    // Predicated region
    $region34: #{tpu_custom_call.1} parent=1 // pred_check
      _
    $region35: #{tpu_custom_call.1} parent=1 // pred_check_branch
      %112 = sbr.rel (0) target = $region37
    $region36: #{tpu_custom_call.1} parent=1 // pred_region
      %114 = dma.done [#allocation9], 128
    $region37: #{tpu_custom_call.1} parent=1 // pred_fallthru
      _
    // Predicated region
    $region38: #{tpu_custom_call.1} parent=1 // pred_check
      _
    $region39: #{tpu_custom_call.1} parent=1 // pred_check_branch
      %116 = sbr.rel (0) target = $region41
    $region40: #{tpu_custom_call.1} parent=1 // pred_region
      %118 = dma.done [#allocation9], 128
    $region41: #{tpu_custom_call.1} parent=1 // pred_fallthru
      _
    %119 = vsyncpa [#allocation3], 1
    %120 = vsyncpa [#allocation6], 1
    %121 = vsyncpa [#allocation4], 1
    %122 = vsyncpa [#allocation9], 1

</llo_original>
